<compile_context>
chip_gen: v5e
topology: v5e:2x2
jax: 0.10.0
libtpu: 0.0.40
codegen_flags: <defaults>
</compile_context>

<pallas_src>
import jax
import jax.numpy as jnp
from jax.experimental import pallas as pl
from jax.experimental.pallas import tpu as pltpu


# ----------------------------------------------------------------------------
# Pass 1: dense input projection  GI = X @ W_ih + b_gi   (parallel over time)
# ----------------------------------------------------------------------------
def _input_proj_kernel(x_ref, w_ih_ref, b_gi_ref, gi_ref):
    gi_ref[...] = (
        jnp.dot(x_ref[...], w_ih_ref[...], preferred_element_type=jnp.float32)
        + b_gi_ref[...]
    )


# ----------------------------------------------------------------------------
# Pass 2: serial GRU recurrence, K timesteps per grid iteration
# ----------------------------------------------------------------------------
def _gru_recurrence_kernel(gi_ref,      # (K, 3H) f32  precomputed input projection
                           w_hh_ref,    # (H, 3H) f32  hidden->gates weights [r|z|n]
                           b_hn_ref,    # (1, H)  f32  n-gate hidden bias only
                           h0_ref,      # (1, H)  f32  initial hidden
                           out_ref,     # (K, H)  f32  hidden state per step
                           h_scratch):  # (1, H)  f32  carried hidden (VMEM scratch)
    t = pl.program_id(0)
    H = h0_ref.shape[-1]
    K = out_ref.shape[0]

    @pl.when(t == 0)
    def _():
        h_scratch[...] = h0_ref[...]

    h = h_scratch[...]              # (1, H)
    w_hh = w_hh_ref[...]            # (H, 3H), VMEM-resident across the grid
    b_hn = b_hn_ref[...]            # (1, H)
    gi = gi_ref[...]                # (K, 3H)

    rows = []
    for k in range(K):              # static unroll; K is small (<= 8)
        gi_k = gi[k:k + 1, :]       # (1, 3H), static slice
        # Only the h-dependent matmul is on the serial critical path.
        gh = jnp.dot(h, w_hh, preferred_element_type=jnp.float32)   # (1, 3H)
        r = jax.nn.sigmoid(gi_k[:, 0:H] + gh[:, 0:H])
        z = jax.nn.sigmoid(gi_k[:, H:2 * H] + gh[:, H:2 * H])
        n = jnp.tanh(gi_k[:, 2 * H:] + r * (gh[:, 2 * H:] + b_hn))
        h = (1.0 - z) * n + z * h
        rows.append(h)

    out_ref[...] = jnp.concatenate(rows, axis=0)   # one dense (K, H) store
    h_scratch[...] = h


def _choose_time_block(T):
    """Block size K for the time axis: K == T (full) or a multiple of 8."""
    if T <= 8:
        return T, T
    K = 8
    Tp = ((T + K - 1) // K) * K
    return K, Tp


def encoder_rnn_sequence(tokens, hidden, params):
    """Run the EncoderRNN over a token sequence.

    tokens: (T,) int32 token ids
    hidden: (1, 1, H) float32 initial hidden
    returns (outputs (T, 1, H) f32, final_hidden (1, 1, H) f32)
    """
    emb = params["embedding"]        # (V, H)  f32
    w_ih = params["w_ih"]            # (H, 3H) f32 (transposed, gate order [r|z|n])
    w_hh = params["w_hh"]            # (H, 3H) f32
    b_ih = params["b_ih"]            # (1, 3H) f32
    b_hh = params["b_hh"]            # (1, 3H) f32
    V, H = emb.shape
    T = int(tokens.shape[0])
    K, Tp = _choose_time_block(T)

    toks = jnp.asarray(tokens, jnp.int32).reshape(T)
    h0 = hidden.reshape(1, H).astype(jnp.float32)

    # Embedding gather once (dense (T, H)); replaces the per-step data-dependent
    # HBM DMA of the previous version.
    # TODO(synk): nn.Embedding lookup itself stays as an XLA gather (jnp.take);
    # a data-dependent row gather has no dense-tile Pallas equivalent here.
    x = jnp.take(emb, toks, axis=0).astype(jnp.float32)        # (T, H)
    if Tp != T:
        x = jnp.pad(x, ((0, Tp - T), (0, 0)))

    # Fold the r/z halves of b_hh into the input-projection bias; keep the
    # n-gate hidden bias separate (needed inside r * (W_hn h + b_hn)).
    b_gi = b_ih + jnp.concatenate(
        [b_hh[:, :2 * H], jnp.zeros((1, H), jnp.float32)], axis=1)   # (1, 3H)
    b_hn = b_hh[:, 2 * H:]                                           # (1, H)

    # ---- Pass 1: dense input projection, parallel over time tiles ----------
    gi = pl.pallas_call(
        _input_proj_kernel,
        out_shape=jax.ShapeDtypeStruct((Tp, 3 * H), jnp.float32),
        grid=(Tp // K,),
        in_specs=[
            pl.BlockSpec((K, H), lambda t: (t, 0)),
            pl.BlockSpec((H, 3 * H), lambda t: (0, 0)),
            pl.BlockSpec((1, 3 * H), lambda t: (0, 0)),
        ],
        out_specs=pl.BlockSpec((K, 3 * H), lambda t: (t, 0)),
        compiler_params=pltpu.CompilerParams(
            dimension_semantics=("parallel",)),
    )(x, w_ih, b_gi)

    # ---- Pass 2: serial recurrence (h-dependent matmul only) ---------------
    outs = pl.pallas_call(
        _gru_recurrence_kernel,
        out_shape=jax.ShapeDtypeStruct((Tp, H), jnp.float32),
        grid=(Tp // K,),
        in_specs=[
            pl.BlockSpec((K, 3 * H), lambda t: (t, 0)),
            pl.BlockSpec((H, 3 * H), lambda t: (0, 0)),   # resident weights
            pl.BlockSpec((1, H), lambda t: (0, 0)),       # resident b_hn
            pl.BlockSpec((1, H), lambda t: (0, 0)),       # resident h0
        ],
        out_specs=pl.BlockSpec((K, H), lambda t: (t, 0)),
        scratch_shapes=[pltpu.VMEM((1, H), jnp.float32)],  # carried hidden
        compiler_params=pltpu.CompilerParams(
            dimension_semantics=("arbitrary",)),           # serial recurrence
    )(gi, w_hh, b_hn, h0)

    outputs = outs[:T].reshape(T, 1, H)
    final_hidden = outputs[T - 1].reshape(1, 1, H)
    return outputs, final_hidden


def encoder_rnn_forward(token, hidden, params):
    """Equivalent of EncoderRNN.forward(input, hidden): one token, one step."""
    H = params["embedding"].shape[1]
    tok = jnp.asarray(token, jnp.int32).reshape(1)
    outputs, h_new = encoder_rnn_sequence(tok, hidden, params)
    return outputs.reshape(1, 1, H), h_new


def init_params(key, input_size, hidden_size):
    """Synthetic init matching nn.Embedding + nn.GRU shapes.

    GRU weights stored gate-fused and transposed: (H, 3H) with columns ordered
    [r | z | n], so kernels compute x @ W directly.  All f32 (PyTorch parity).
    """
    k_emb, k_wih, k_whh, k_bih, k_bhh = jax.random.split(key, 5)
    H = hidden_size
    bound = 1.0 / jnp.sqrt(jnp.float32(H))
    return {
        "embedding": jax.random.normal(k_emb, (input_size, H), jnp.float32),
        "w_ih": jax.random.uniform(k_wih, (H, 3 * H), jnp.float32, -bound, bound),
        "w_hh": jax.random.uniform(k_whh, (H, 3 * H), jnp.float32, -bound, bound),
        "b_ih": jax.random.uniform(k_bih, (1, 3 * H), jnp.float32, -bound, bound),
        "b_hh": jax.random.uniform(k_bhh, (1, 3 * H), jnp.float32, -bound, bound),
    }


def _reference_sequence(tokens, hidden, params):
    """Pure-JAX reference with exact PyTorch nn.GRU semantics (all f32)."""
    H = params["embedding"].shape[1]
    h = hidden.reshape(1, H).astype(jnp.float32)
    outs = []
    for i in range(int(tokens.shape[0])):
        x = params["embedding"][tokens[i]].reshape(1, H)
        gi = x @ params["w_ih"] + params["b_ih"]
        gh = h @ params["w_hh"] + params["b_hh"]
        i_r, i_z, i_n = gi[:, 0:H], gi[:, H:2 * H], gi[:, 2 * H:3 * H]
        h_r, h_z, h_n = gh[:, 0:H], gh[:, H:2 * H], gh[:, 2 * H:3 * H]
        r = jax.nn.sigmoid(i_r + h_r)
        z = jax.nn.sigmoid(i_z + h_z)
        n = jnp.tanh(i_n + r * h_n)
        h = (1.0 - z) * n + z * h
        outs.append(h)
    outputs = jnp.stack(outs, axis=0).reshape(len(outs), 1, H)
    return outputs, outputs[-1].reshape(1, 1, H)


if __name__ == "__main__":
    input_size = 16     # vocab size
    hidden_size = 32
    seq_len = 8         # exercises the K=8 blocked recurrence path

    root = jax.random.PRNGKey(0)
    k_params, k_tok, k_hid = jax.random.split(root, 3)

    params = init_params(k_params, input_size, hidden_size)
    tokens = jax.random.randint(k_tok, (seq_len,), 0, input_size, jnp.int32)
    hidden = jax.random.normal(k_hid, (1, 1, hidden_size), jnp.float32)

    # 1) Single-step forward (exact EncoderRNN.forward semantics).
    out1, h1 = encoder_rnn_forward(tokens[0], hidden, params)
    out1, h1 = jax.block_until_ready((out1, h1))

    # 2) Whole sequence: hoisted input projection + blocked serial recurrence.
    outs, h_final = encoder_rnn_sequence(tokens, hidden, params)
    outs, h_final = jax.block_until_ready((outs, h_final))

    ref_outs, ref_h = _reference_sequence(tokens, hidden, params)

    assert out1.shape == (1, 1, hidden_size) and h1.shape == (1, 1, hidden_size)
    assert outs.shape == (seq_len, 1, hidden_size)
    assert h_final.shape == (1, 1, hidden_size)
    assert jnp.allclose(out1, ref_outs[0].reshape(1, 1, -1), atol=1e-4, rtol=1e-4)
    assert jnp.allclose(h1, ref_outs[0].reshape(1, 1, -1), atol=1e-4, rtol=1e-4)
    assert jnp.allclose(outs, ref_outs, atol=1e-4, rtol=1e-4)
    assert jnp.allclose(h_final, ref_h, atol=1e-4, rtol=1e-4)

    print("KERNEL_OK")
</pallas_src>

<mosaic_0001>
module attributes {stable_mosaic.version = 11 : i64} {
  func.func @_input_proj_kernel(%arg0: i32, %arg1: memref<1x32xf32, #tpu.memory_space<vmem>>, %arg2: memref<32x96xf32, #tpu.memory_space<vmem>>, %arg3: memref<1x96xf32, #tpu.memory_space<vmem>>, %arg4: memref<1x96xf32, #tpu.memory_space<vmem>>) attributes {dimension_semantics = [#tpu.dimension_semantics<parallel>], iteration_bounds = array<i64: 1>, scalar_prefetch = 0 : i64, scratch_operands = 0 : i64, tpu.core_type = #tpu.core_type<tc>, window_params = [{transform_indices = @transform_0, window_bounds = array<i64: 1, 32>}, {pipeline_mode = #tpu.pipeline_mode<synchronous>, transform_indices = @transform_1, window_bounds = array<i64: 32, 96>}, {pipeline_mode = #tpu.pipeline_mode<synchronous>, transform_indices = @transform_2, window_bounds = array<i64: 1, 96>}, {transform_indices = @transform_3, window_bounds = array<i64: 1, 96>}]} {
    %c0 = arith.constant 0 : index
    %c0_0 = arith.constant 0 : index
    %0 = vector.load %arg1[%c0, %c0_0] : memref<1x32xf32, #tpu.memory_space<vmem>>, vector<1x32xf32>
    %c0_1 = arith.constant 0 : index
    %c0_2 = arith.constant 0 : index
    %1 = vector.load %arg2[%c0_1, %c0_2] : memref<32x96xf32, #tpu.memory_space<vmem>>, vector<32x96xf32>
    %cst = arith.constant dense<0.000000e+00> : vector<1x96xf32>
    %2 = tpu.matmul %0, %1, %cst {dimension_numbers = #tpu.dot_dimension_numbers<[1], [0], [0], [1], [0, 0, 1, 1], [], []>} : vector<1x32xf32>, vector<32x96xf32>, vector<1x96xf32> -> vector<1x96xf32>
    %c0_3 = arith.constant 0 : index
    %c0_4 = arith.constant 0 : index
    %3 = vector.load %arg3[%c0_3, %c0_4] : memref<1x96xf32, #tpu.memory_space<vmem>>, vector<1x96xf32>
    %4 = arith.addf %2, %3 : vector<1x96xf32>
    %c0_5 = arith.constant 0 : index
    %c0_6 = arith.constant 0 : index
    %5 = vector.load %arg4[%c0_5, %c0_6] : memref<1x96xf32, #tpu.memory_space<vmem>>, vector<1x96xf32>
    tpu.vector_store %arg4[%c0_5, %c0_6], %4 {strides = array<i32>} : memref<1x96xf32, #tpu.memory_space<vmem>>, vector<1x96xf32>,
    return
  }
  func.func @transform_0(%arg0: i32) -> (i32, i32) {
    %c0_i32 = arith.constant 0 : i32
    %c0_i32_0 = arith.constant 0 : i32
    return %arg0, %c0_i32 : i32, i32
  }
  func.func @transform_1(%arg0: i32) -> (i32, i32) {
    %c0_i32 = arith.constant 0 : i32
    %c0_i32_0 = arith.constant 0 : i32
    %c0_i32_1 = arith.constant 0 : i32
    return %c0_i32, %c0_i32_0 : i32, i32
  }
  func.func @transform_2(%arg0: i32) -> (i32, i32) {
    %c0_i32 = arith.constant 0 : i32
    %c0_i32_0 = arith.constant 0 : i32
    %c0_i32_1 = arith.constant 0 : i32
    return %c0_i32, %c0_i32_0 : i32, i32
  }
  func.func @transform_3(%arg0: i32) -> (i32, i32) {
    %c0_i32 = arith.constant 0 : i32
    %c0_i32_0 = arith.constant 0 : i32
    return %arg0, %c0_i32 : i32, i32
  }
}

</mosaic_0001>

<llo_original>
// kernel: tpu_custom_call.1
$region0: #{tpu_custom_call.1}
  #allocation0 [shape = 'u32[]', space=smem, size = 0x4, offset = 0x4, fixed_abs, tag = 'smem constant byte address 0x4 - core index']
  #allocation1 [shape = 'u32[72,128]{1,0:T(1,128)}', space=vmem, size = 0x9000, scoped, tag = 'internal scratch']
  %s0 = inlined_call_operand.hbm [shape: f32[1,32], index: 0, kind: input, shape index: {}]
  %s1 = inlined_call_operand.hbm [shape: f32[32,96], index: 1, kind: input, shape index: {}]
  %s2 = inlined_call_operand.vmem [shape: f32[1,96], index: 2, kind: input, shape index: {}]
  %s3 = inlined_call_operand.hbm [shape: f32[1,96], index: 3, kind: output, shape index: {}]
  %s4 = sld [smem:[#allocation0]]
  $region30: #{tpu_custom_call.1} parent=0
    _
  %s6 = ssub.s32 1, %s4
  %s7 = scalar_select 0, %s6, %s4
  $region1: #{tpu_custom_call.1} parent=0
    #allocation2 [shape = 'u8[512]{0}', space=vmem, size = 0x400, scoped, tag = 'input window, operand 0, single buffered']
    #allocation3 [shape = 's32[1]{0}', space=sflag, size = 0x4, scoped, tag = 'scoped memory for tpu_custom_call.1']
    #allocation4 [shape = 's32[1]{0}', space=sflag, size = 0x4, scoped, tag = 'scoped memory for tpu_custom_call.1']
    #allocation5 [shape = 'u8[16384]{0}', space=vmem, size = 0x4000, scoped, tag = 'input window, operand 1, single buffered']
    #allocation6 [shape = 's32[1]{0}', space=sflag, size = 0x4, scoped, tag = 'scoped memory for tpu_custom_call.1']
    #allocation7 [shape = 'u8[512]{0}', space=vmem, size = 0x400, scoped, tag = 'output window, operand 0, single buffered']
    %8 = vsyncpa [#allocation3], 0
    %9 = vsyncpa [#allocation6], 0
    %10 = vsyncpa [#allocation4], 0
    // Predicated region
    $region2: #{tpu_custom_call.1} parent=1 // pred_check
      _
    $region3: #{tpu_custom_call.1} parent=1 // pred_check_branch
      %12 = sbr.rel (0) target = $region5
    $region4: #{tpu_custom_call.1} parent=1 // pred_region
      %14 = vsyncadd [#allocation3], 0
      %s16 = sshll.u32 %s0, 4
      %s17 = int_to_ptr.hbm [resolvable:$true] %s16
      %s18 = sshll.u32 [#allocation2], 4
      %s19 = int_to_ptr.vmem [resolvable:$true] %s18
      %21 = dma.hbm_to_vmem [thread:$0]  %s17, 16, %s19, [#allocation3]
    $region5: #{tpu_custom_call.1} parent=1 // pred_fallthru
      _
    // Predicated region
    $region6: #{tpu_custom_call.1} parent=1 // pred_check
      _
    $region7: #{tpu_custom_call.1} parent=1 // pred_check_branch
      %23 = sbr.rel (0) target = $region9
    $region8: #{tpu_custom_call.1} parent=1 // pred_region
      %25 = vsyncadd [#allocation6], 0
      %s26 = sshll.u32 %s1, 4
      %s27 = int_to_ptr.hbm [resolvable:$true] %s26
      %s28 = sshll.u32 [#allocation5], 4
      %s29 = int_to_ptr.vmem [resolvable:$true] %s28
      %34 = dma.hbm_to_vmem [thread:$0]  %s27, 512, %s29, [#allocation6], 128, 128, 8
    $region9: #{tpu_custom_call.1} parent=1 // pred_fallthru
      _
    // Predicated region
    $region10: #{tpu_custom_call.1} parent=1 // pred_check
      _
    $region11: #{tpu_custom_call.1} parent=1 // pred_check_branch
      %36 = sbr.rel (0) target = $region13
    $region12: #{tpu_custom_call.1} parent=1 // pred_region
      _
    $region13: #{tpu_custom_call.1} parent=1 // pred_fallthru
      _
    // Predicated region
    $region14: #{tpu_custom_call.1} parent=1 // pred_check
      _
    $region15: #{tpu_custom_call.1} parent=1 // pred_check_branch
      %38 = sbr.rel (0) target = $region17
    $region16: #{tpu_custom_call.1} parent=1 // pred_region
      %40 = dma.done [#allocation3], 16
    $region17: #{tpu_custom_call.1} parent=1 // pred_fallthru
      _
    // Predicated region
    $region18: #{tpu_custom_call.1} parent=1 // pred_check
      _
    $region19: #{tpu_custom_call.1} parent=1 // pred_check_branch
      %42 = sbr.rel (0) target = $region21
    $region20: #{tpu_custom_call.1} parent=1 // pred_region
      %44 = dma.done [#allocation6], 512
    $region21: #{tpu_custom_call.1} parent=1 // pred_fallthru
      _
    %v45 = vld [vmem:[#allocation2] sm:$0x1]
    %v46 = vld [vmem:[#allocation5] sm:$0xff]
    %v47 = vld [vmem:[#allocation5 + $0x8] sm:$0xff]
    %v48 = vld [vmem:[#allocation5 + $0x10] sm:$0xff]
    %v49 = vld [vmem:[#allocation5 + $0x18] sm:$0xff]
    %v50 = vld [vmem:[%s2] sm:$0x1]
    %vm51 = vcmask 261120
    %v53 = vsel %vm51, %v45, 0
    %55 = vmatpush.msra.mxu0 0.0
    %56 = vmatpush.msra.mxu0 0.0
    %57 = vmatpush.msra.mxu0 0.0
    %58 = vmatpush.msra.mxu0 0.0
    %59 = vmatpush.msra.mxu0 0.0
    %60 = vmatpush.msra.mxu0 0.0
    %61 = vmatpush.msra.mxu0 0.0
    %62 = vmatpush.msra.mxu0 0.0
    %63 = vmatpush.msra.mxu0 0.0
    %64 = vmatpush.msra.mxu0 0.0
    %65 = vmatpush.msra.mxu0 0.0
    %66 = vmatpush.msra.mxu0 0.0
    %67 = vmatpush.msra.mxu0 %v49
    %68 = vmatpush.msra.mxu0 %v48
    %69 = vmatpush.msra.mxu0 %v47
    %70 = vmatpush.msra.mxu0 %v46
    %71 = vmatmul.f32.gmra.mxu0 %v53
    %v72 = vpop.f32.mrf.mxu0
    %v73 = vadd.f32 %v50, %v72
    %74 = vdwg.mxu0
    %vm75 = vcmask 778240
    %76 = vst.msk [vmem:[#allocation7] sm:$0x1] %vm75, %v73
    // Predicated region
    $region22: #{tpu_custom_call.1} parent=1 // pred_check
      _
    $region23: #{tpu_custom_call.1} parent=1 // pred_check_branch
      %78 = sbr.rel (0) target = $region25
    $region24: #{tpu_custom_call.1} parent=1 // pred_region
      %80 = vsyncadd [#allocation4], 0
      %s82 = sshll.u32 [#allocation7], 4
      %s83 = int_to_ptr.vmem [resolvable:$true] %s82
      %s84 = sshll.u32 %s3, 4
      %s85 = int_to_ptr.hbm [resolvable:$true] %s84
      %87 = dma.vmem_to_hbm [thread:$0]  %s83, 16, %s85, [#allocation4]
    $region25: #{tpu_custom_call.1} parent=1 // pred_fallthru
      _
    // Predicated region
    $region26: #{tpu_custom_call.1} parent=1 // pred_check
      _
    $region27: #{tpu_custom_call.1} parent=1 // pred_check_branch
      %89 = sbr.rel (0) target = $region29
    $region28: #{tpu_custom_call.1} parent=1 // pred_region
      %91 = dma.done [#allocation4], 16
    $region29: #{tpu_custom_call.1} parent=1 // pred_fallthru
      _
    %92 = vsyncpa [#allocation3], 1
    %93 = vsyncpa [#allocation6], 1
    %94 = vsyncpa [#allocation4], 1

</llo_original>
